<compile_context>
chip_gen: v5e
topology: v5e:2x2
jax: 0.10.0
libtpu: 0.0.40
codegen_flags: <defaults>
</compile_context>

<pallas_src>
import math

import jax
import jax.numpy as jnp
from jax.experimental import pallas as pl
from jax.experimental.pallas import tpu as pltpu


# --------------------------------------------------------------------------- #
# helpers
# --------------------------------------------------------------------------- #
def _round_up(x: int, m: int) -> int:
    return (x + m - 1) // m * m


def _group_factor(n_rbf: int) -> int:
    # Smallest G such that G * n_rbf is a multiple of 128 (full lane width).
    return 128 // math.gcd(n_rbf, 128)


def _sublane_multiple(dtype) -> int:
    # f32 -> 8, bf16 -> 16, int8/fp8 -> 32 (sublane tiling of the output dtype).
    return max(8, 32 // jnp.dtype(dtype).itemsize)


def precompute_rbf_constants(offsets, coeff):
    """Host-side, once-per-module constants for both kernel paths."""
    n_rbf = int(offsets.shape[0])
    offsets = jnp.asarray(offsets, jnp.float32).reshape(n_rbf)
    coeff = jnp.broadcast_to(jnp.asarray(coeff, jnp.float32), (n_rbf,))
    G = _group_factor(n_rbf)
    W = G * n_rbf
    # One-hot expansion matrix E[g, g*n_rbf + j] = 1  (drives the MXU broadcast).
    expand = (jnp.arange(W)[None, :] // n_rbf
              == jnp.arange(G)[:, None]).astype(jnp.float32)              # (G, W)
    const_grouped = jnp.stack([jnp.tile(coeff, G), jnp.tile(offsets, G)])  # (2, W)
    const_flat = jnp.stack([coeff, offsets])                               # (2, n_rbf)
    return dict(n_rbf=n_rbf, G=G, W=W, expand=expand,
                const_grouped=const_grouped, const_flat=const_flat)


# --------------------------------------------------------------------------- #
# kernels
# --------------------------------------------------------------------------- #
def _rbf_grouped_kernel(x_ref, expand_ref, const_ref, o_ref):
    # x_ref:      (TR, G)  f32 distances, G edges packed per output row
    # expand_ref: (G, W)   f32 one-hot, W = G * n_rbf (resident constant)
    # const_ref:  (2, W)   f32: row 0 = tiled coeff, row 1 = tiled offsets
    # o_ref:      (TR, W)  lane-dense output tile (W is a multiple of 128)
    xw = jnp.dot(x_ref[...], expand_ref[...],
                 preferred_element_type=jnp.float32)          # (TR, W) on MXU
    c = const_ref[...]                                        # (2, W)
    diff = xw - c[1:2, :]
    o_ref[...] = jnp.exp(c[0:1, :] * diff * diff).astype(o_ref.dtype)


def _rbf_flat_kernel(x_ref, const_ref, o_ref):
    # Fallback path (N not a multiple of G): classic (TN, n_rbf) layout.
    # x_ref: (TN, 1); const_ref: (2, n_rbf); o_ref: (TN, n_rbf)
    c = const_ref[...]
    diff = x_ref[...] - c[1:2, :]
    o_ref[...] = jnp.exp(c[0:1, :] * diff * diff).astype(o_ref.dtype)


# --------------------------------------------------------------------------- #
# wrapper
# --------------------------------------------------------------------------- #
def gaussian_rbf_pallas(inputs, offsets, coeff, *, consts=None,
                        tile_rows=2048, tile_flat=32768, out_dtype=jnp.float32):
    """inputs: any shape (float).  offsets/coeff: (n_rbf,).
    Returns inputs.shape + (n_rbf,) in `out_dtype` (default f32, PyTorch parity)."""
    if consts is None:
        consts = precompute_rbf_constants(offsets, coeff)
    n_rbf, G, W = consts["n_rbf"], consts["G"], consts["W"]
    out_dtype = jnp.dtype(out_dtype)

    orig_shape = inputs.shape
    x = jnp.ravel(inputs).astype(jnp.float32)
    n = x.shape[0]
    sub = _sublane_multiple(out_dtype)

    if n == 0:  # degenerate: nothing to do
        return jnp.zeros((*orig_shape, n_rbf), dtype=out_dtype)

    compiler_params = pltpu.CompilerParams(
        dimension_semantics=("parallel",),        # shards grid steps across v7x TCs
        vmem_limit_bytes=32 * 1024 * 1024,        # ~11 MiB actually used; safe on v7x (64 MiB)
    )
    cost_estimate = pl.CostEstimate(
        flops=int(5 * n * n_rbf + 2 * n * W),
        transcendentals=int(n * n_rbf),
        bytes_accessed=int(4 * n + out_dtype.itemsize * n * n_rbf),
    )

    if n >= G and n % G == 0:
        # ---- lane-dense grouped path: view (N, n_rbf) as (N//G, G*n_rbf) ----
        n_groups = n // G
        if n_groups <= sub:
            tr = n_groups                                         # single full block
        else:
            tr = max(sub, min(tile_rows, _round_up(pl.cdiv(n_groups, 2), sub)))
            tr = min(tr, _round_up(n_groups, sub))
        grid = (pl.cdiv(n_groups, tr),)
        x2 = x.reshape(n_groups, G)                               # free reshape

        out = pl.pallas_call(
            _rbf_grouped_kernel,
            out_shape=jax.ShapeDtypeStruct((n_groups, W), out_dtype),
            grid_spec=pltpu.PrefetchScalarGridSpec(
                num_scalar_prefetch=0,
                grid=grid,
                in_specs=[
                    pl.BlockSpec((tr, G), lambda i: (i, 0)),      # input rows
                    pl.BlockSpec((G, W), lambda i: (0, 0)),       # one-hot (resident)
                    pl.BlockSpec((2, W), lambda i: (0, 0)),       # coeff/offsets (resident)
                ],
                out_specs=pl.BlockSpec((tr, W), lambda i: (i, 0)),
            ),
            compiler_params=compiler_params,
            cost_estimate=cost_estimate,
        )(x2, consts["expand"], consts["const_grouped"])
        out = out.reshape(n, n_rbf)                               # free reshape
    else:
        # ---- ragged fallback: no padding, Pallas masks the last block ----
        if n <= sub:
            tn = n
        else:
            tn = max(sub, min(tile_flat, _round_up(pl.cdiv(n, 2), sub)))
            tn = min(tn, _round_up(n, sub))
        grid = (pl.cdiv(n, tn),)
        x2 = x.reshape(n, 1)

        out = pl.pallas_call(
            _rbf_flat_kernel,
            out_shape=jax.ShapeDtypeStruct((n, n_rbf), out_dtype),
            grid_spec=pltpu.PrefetchScalarGridSpec(
                num_scalar_prefetch=0,
                grid=grid,
                in_specs=[
                    pl.BlockSpec((tn, 1), lambda i: (i, 0)),
                    pl.BlockSpec((2, n_rbf), lambda i: (0, 0)),
                ],
                out_specs=pl.BlockSpec((tn, n_rbf), lambda i: (i, 0)),
            ),
            compiler_params=compiler_params,
            cost_estimate=cost_estimate,
        )(x2, consts["const_flat"])

    return out.reshape(*orig_shape, n_rbf)


class GaussianRBFJax:
    """Forward-pass re-implementation of GaussianRBF (non-trainable buffers)."""
    # TODO(synk): trainable=True (learned widths/offsets) would just re-run
    # precompute_rbf_constants per step; constants here are static buffers.

    def __init__(self, n_rbf: int, cutoff: float, start: float = 0.0,
                 gamma=None, out_dtype=jnp.float32):
        self.n_rbf = n_rbf
        self.gamma = gamma
        self.out_dtype = out_dtype
        self.offsets = jnp.linspace(start, cutoff, n_rbf, dtype=jnp.float32)
        width = jnp.abs(self.offsets[1] - self.offsets[0])
        self.widths = width * jnp.ones_like(self.offsets)
        if gamma is not None:
            self.coeff = jnp.full((n_rbf,), -float(gamma), dtype=jnp.float32)
        else:
            self.coeff = -0.5 / (self.widths ** 2)
        # precompute tiled/one-hot constants once (host side)
        self._consts = precompute_rbf_constants(self.offsets, self.coeff)

    def __call__(self, inputs):
        return gaussian_rbf_pallas(inputs, self.offsets, self.coeff,
                                   consts=self._consts, out_dtype=self.out_dtype)


def _reference(inputs, offsets, coeff):
    diff = inputs[..., None] - offsets
    return jnp.exp(coeff * diff ** 2)


if __name__ == "__main__":
    key = jax.random.PRNGKey(0)
    n_rbf, cutoff = 20, 5.0
    k1, k2 = jax.random.split(key)

    mod = GaussianRBFJax(n_rbf=n_rbf, cutoff=cutoff, start=0.0, gamma=None)

    # (a) edge count multiple of 32 -> lane-dense grouped path
    d1 = jax.random.uniform(k1, (256,), dtype=jnp.float32) * cutoff
    out1 = jax.block_until_ready(mod(d1))
    ref1 = _reference(d1, mod.offsets, mod.coeff)
    assert out1.shape == (256, n_rbf), out1.shape
    assert jnp.allclose(out1, ref1, atol=1e-6, rtol=1e-6), float(jnp.max(jnp.abs(out1 - ref1)))

    # (b) ragged edge count + 2-D leading shape -> flat fallback path (no pad/slice)
    d2 = jax.random.uniform(k2, (2, 100), dtype=jnp.float32) * cutoff
    out2 = jax.block_until_ready(mod(d2))
    ref2 = _reference(d2, mod.offsets, mod.coeff)
    assert out2.shape == (2, 100, n_rbf), out2.shape
    assert jnp.allclose(out2, ref2, atol=1e-6, rtol=1e-6), float(jnp.max(jnp.abs(out2 - ref2)))

    # (c) gamma path + optional bf16 writeback (compute stays f32)
    mod_g = GaussianRBFJax(n_rbf=n_rbf, cutoff=cutoff, gamma=1.0, out_dtype=jnp.bfloat16)
    out3 = jax.block_until_ready(mod_g(d1))
    ref3 = _reference(d1, mod_g.offsets, mod_g.coeff)
    assert out3.dtype == jnp.bfloat16
    assert jnp.allclose(out3.astype(jnp.float32), ref3, atol=2e-2, rtol=2e-2)

    print("KERNEL_OK")
</pallas_src>

<mosaic_0001>
module attributes {stable_mosaic.version = 11 : i64} {
  func.func @_rbf_grouped_kernel(%arg0: i32, %arg1: memref<8x32xf32, #tpu.memory_space<vmem>>, %arg2: memref<32x640xf32, #tpu.memory_space<vmem>>, %arg3: memref<2x640xf32, #tpu.memory_space<vmem>>, %arg4: memref<8x640xf32, #tpu.memory_space<vmem>>) attributes {dimension_semantics = [#tpu.dimension_semantics<parallel>], iteration_bounds = array<i64: 1>, scalar_prefetch = 0 : i64, scratch_operands = 0 : i64, tpu.core_type = #tpu.core_type<tc>, window_params = [{transform_indices = @transform_0, window_bounds = array<i64: 8, 32>}, {pipeline_mode = #tpu.pipeline_mode<synchronous>, transform_indices = @transform_1, window_bounds = array<i64: 32, 640>}, {pipeline_mode = #tpu.pipeline_mode<synchronous>, transform_indices = @transform_2, window_bounds = array<i64: 2, 640>}, {transform_indices = @transform_3, window_bounds = array<i64: 8, 640>}]} {
    %c0 = arith.constant 0 : index
    %c0_0 = arith.constant 0 : index
    %0 = vector.load %arg1[%c0, %c0_0] : memref<8x32xf32, #tpu.memory_space<vmem>>, vector<8x32xf32>
    %c0_1 = arith.constant 0 : index
    %c0_2 = arith.constant 0 : index
    %1 = vector.load %arg2[%c0_1, %c0_2] : memref<32x640xf32, #tpu.memory_space<vmem>>, vector<32x640xf32>
    %cst = arith.constant dense<0.000000e+00> : vector<8x640xf32>
    %2 = tpu.matmul %0, %1, %cst {dimension_numbers = #tpu.dot_dimension_numbers<[1], [0], [0], [1], [0, 0, 1, 1], [], []>} : vector<8x32xf32>, vector<32x640xf32>, vector<8x640xf32> -> vector<8x640xf32>
    %c0_3 = arith.constant 0 : index
    %c0_4 = arith.constant 0 : index
    %3 = vector.load %arg3[%c0_3, %c0_4] : memref<2x640xf32, #tpu.memory_space<vmem>>, vector<2x640xf32>
    %4 = vector.extract_strided_slice %3 {offsets = [1, 0], sizes = [1, 640], strides = [1, 1]} : vector<2x640xf32> to vector<1x640xf32>
    %5 = vector.broadcast %4 : vector<1x640xf32> to vector<8x640xf32>
    %6 = arith.subf %2, %5 : vector<8x640xf32>
    %7 = vector.extract_strided_slice %3 {offsets = [0, 0], sizes = [1, 640], strides = [1, 1]} : vector<2x640xf32> to vector<1x640xf32>
    %8 = vector.broadcast %7 : vector<1x640xf32> to vector<8x640xf32>
    %9 = arith.mulf %8, %6 : vector<8x640xf32>
    %10 = arith.mulf %9, %6 : vector<8x640xf32>
    %11 = math.exp %10 : vector<8x640xf32>
    %c0_5 = arith.constant 0 : index
    %c0_6 = arith.constant 0 : index
    %12 = vector.load %arg4[%c0_5, %c0_6] : memref<8x640xf32, #tpu.memory_space<vmem>>, vector<8x640xf32>
    tpu.vector_store %arg4[%c0_5, %c0_6], %11 {strides = array<i32>} : memref<8x640xf32, #tpu.memory_space<vmem>>, vector<8x640xf32>,
    return
  }
  func.func @transform_0(%arg0: i32) -> (i32, i32) {
    %c0_i32 = arith.constant 0 : i32
    %c0_i32_0 = arith.constant 0 : i32
    return %arg0, %c0_i32 : i32, i32
  }
  func.func @transform_1(%arg0: i32) -> (i32, i32) {
    %c0_i32 = arith.constant 0 : i32
    %c0_i32_0 = arith.constant 0 : i32
    %c0_i32_1 = arith.constant 0 : i32
    return %c0_i32, %c0_i32_0 : i32, i32
  }
  func.func @transform_2(%arg0: i32) -> (i32, i32) {
    %c0_i32 = arith.constant 0 : i32
    %c0_i32_0 = arith.constant 0 : i32
    %c0_i32_1 = arith.constant 0 : i32
    return %c0_i32, %c0_i32_0 : i32, i32
  }
  func.func @transform_3(%arg0: i32) -> (i32, i32) {
    %c0_i32 = arith.constant 0 : i32
    %c0_i32_0 = arith.constant 0 : i32
    return %arg0, %c0_i32 : i32, i32
  }
}

</mosaic_0001>

<llo_original>
// kernel: tpu_custom_call.1
$region0: #{tpu_custom_call.1}
  #allocation0 [shape = 'u32[]', space=smem, size = 0x4, offset = 0x4, fixed_abs, tag = 'smem constant byte address 0x4 - core index']
  #allocation1 [shape = 'u32[72,128]{1,0:T(1,128)}', space=vmem, size = 0x9000, scoped, tag = 'internal scratch']
  %s0 = inlined_call_operand.hbm [shape: f32[8,32], index: 0, kind: input, shape index: {}]
  %s1 = inlined_call_operand.hbm [shape: f32[32,640], index: 1, kind: input, shape index: {}]
  %s2 = inlined_call_operand.hbm [shape: f32[2,640], index: 2, kind: input, shape index: {}]
  %s3 = inlined_call_operand.hbm [shape: f32[8,640], index: 3, kind: output, shape index: {}]
  %s4 = sld [smem:[#allocation0]]
  $region34: #{tpu_custom_call.1} parent=0
    _
  %s6 = ssub.s32 1, %s4
  %s7 = scalar_select 0, %s6, %s4
  $region1: #{tpu_custom_call.1} parent=0
    #allocation2 [shape = 'u8[4096]{0}', space=vmem, size = 0x1000, scoped, tag = 'input window, operand 0, single buffered']
    #allocation3 [shape = 's32[1]{0}', space=sflag, size = 0x4, scoped, tag = 'scoped memory for tpu_custom_call.1']
    #allocation4 [shape = 's32[1]{0}', space=sflag, size = 0x4, scoped, tag = 'scoped memory for tpu_custom_call.1']
    #allocation5 [shape = 'u8[81920]{0}', space=vmem, size = 0x14000, scoped, tag = 'input window, operand 1, single buffered']
    #allocation6 [shape = 's32[1]{0}', space=sflag, size = 0x4, scoped, tag = 'scoped memory for tpu_custom_call.1']
    #allocation7 [shape = 'u8[5120]{0}', space=vmem, size = 0x1400, scoped, tag = 'input window, operand 2, single buffered']
    #allocation8 [shape = 'u8[20480]{0}', space=vmem, size = 0x5000, scoped, tag = 'output window, operand 0, single buffered']
    %8 = vsyncpa [#allocation3], 0
    %9 = vsyncpa [#allocation6], 0
    %10 = vsyncpa [#allocation4], 0
    // Predicated region
    $region2: #{tpu_custom_call.1} parent=1 // pred_check
      _
    $region3: #{tpu_custom_call.1} parent=1 // pred_check_branch
      %12 = sbr.rel (0) target = $region5
    $region4: #{tpu_custom_call.1} parent=1 // pred_region
      %14 = vsyncadd [#allocation3], 0
      %s16 = sshll.u32 %s0, 4
      %s17 = int_to_ptr.hbm [resolvable:$true] %s16
      %s18 = sshll.u32 [#allocation2], 4
      %s19 = int_to_ptr.vmem [resolvable:$true] %s18
      %21 = dma.hbm_to_vmem [thread:$0]  %s17, 128, %s19, [#allocation3]
    $region5: #{tpu_custom_call.1} parent=1 // pred_fallthru
      _
    // Predicated region
    $region6: #{tpu_custom_call.1} parent=1 // pred_check
      _
    $region7: #{tpu_custom_call.1} parent=1 // pred_check_branch
      %23 = sbr.rel (0) target = $region9
    $region8: #{tpu_custom_call.1} parent=1 // pred_region
      %25 = vsyncadd [#allocation6], 0
      %s26 = sshll.u32 %s1, 4
      %s27 = int_to_ptr.hbm [resolvable:$true] %s26
      %s28 = sshll.u32 [#allocation5], 4
      %s29 = int_to_ptr.vmem [resolvable:$true] %s28
      %34 = dma.hbm_to_vmem [thread:$0]  %s27, 2560, %s29, [#allocation6], 640, 640, 40
    $region9: #{tpu_custom_call.1} parent=1 // pred_fallthru
      _
    // Predicated region
    $region10: #{tpu_custom_call.1} parent=1 // pred_check
      _
    $region11: #{tpu_custom_call.1} parent=1 // pred_check_branch
      %36 = sbr.rel (0) target = $region13
    $region12: #{tpu_custom_call.1} parent=1 // pred_region
      %38 = vsyncadd [#allocation6], 0
      %s40 = sshll.u32 %s2, 4
      %s41 = int_to_ptr.hbm [resolvable:$true] %s40
      %s42 = sshll.u32 [#allocation7], 4
      %s43 = int_to_ptr.vmem [resolvable:$true] %s42
      %45 = dma.hbm_to_vmem [thread:$0]  %s41, 160, %s43, [#allocation6]
    $region13: #{tpu_custom_call.1} parent=1 // pred_fallthru
      _
    // Predicated region
    $region14: #{tpu_custom_call.1} parent=1 // pred_check
      _
    $region15: #{tpu_custom_call.1} parent=1 // pred_check_branch
      %47 = sbr.rel (0) target = $region17
    $region16: #{tpu_custom_call.1} parent=1 // pred_region
      %49 = dma.done [#allocation3], 128
    $region17: #{tpu_custom_call.1} parent=1 // pred_fallthru
      _
    // Predicated region
    $region18: #{tpu_custom_call.1} parent=1 // pred_check
      _
    $region19: #{tpu_custom_call.1} parent=1 // pred_check_branch
      %51 = sbr.rel (0) target = $region21
    $region20: #{tpu_custom_call.1} parent=1 // pred_region
      %53 = dma.done [#allocation6], 2560
    $region21: #{tpu_custom_call.1} parent=1 // pred_fallthru
      _
    // Predicated region
    $region22: #{tpu_custom_call.1} parent=1 // pred_check
      _
    $region23: #{tpu_custom_call.1} parent=1 // pred_check_branch
      %55 = sbr.rel (0) target = $region25
    $region24: #{tpu_custom_call.1} parent=1 // pred_region
      %57 = dma.done [#allocation6], 160
    $region25: #{tpu_custom_call.1} parent=1 // pred_fallthru
      _
    %v58 = vld [vmem:[#allocation2] sm:$0xff]
    %v59 = vld [vmem:[#allocation5] sm:$0xff]
    %v60 = vld [vmem:[#allocation5 + $0x8] sm:$0xff]
    %v61 = vld [vmem:[#allocation5 + $0x10] sm:$0xff]
    %v62 = vld [vmem:[#allocation5 + $0x18] sm:$0xff]
    %v63 = vld [vmem:[#allocation5 + $0x20] sm:$0xff]
    %v64 = vld [vmem:[#allocation5 + $0x28] sm:$0xff]
    %v65 = vld [vmem:[#allocation5 + $0x30] sm:$0xff]
    %v66 = vld [vmem:[#allocation5 + $0x38] sm:$0xff]
    %v67 = vld [vmem:[#allocation5 + $0x40] sm:$0xff]
    %v68 = vld [vmem:[#allocation5 + $0x48] sm:$0xff]
    %v69 = vld [vmem:[#allocation5 + $0x50] sm:$0xff]
    %v70 = vld [vmem:[#allocation5 + $0x58] sm:$0xff]
    %v71 = vld [vmem:[#allocation5 + $0x60] sm:$0xff]
    %v72 = vld [vmem:[#allocation5 + $0x68] sm:$0xff]
    %v73 = vld [vmem:[#allocation5 + $0x70] sm:$0xff]
    %v74 = vld [vmem:[#allocation5 + $0x78] sm:$0xff]
    %v75 = vld [vmem:[#allocation5 + $0x80] sm:$0xff]
    %v76 = vld [vmem:[#allocation5 + $0x88] sm:$0xff]
    %v77 = vld [vmem:[#allocation5 + $0x90] sm:$0xff]
    %v78 = vld [vmem:[#allocation5 + $0x98] sm:$0xff]
    %vm79 = vcmask 261120
    %v81 = vsel %vm79, %v58, 0
    %83 = vmatpush.msra.mxu0 0.0
    %84 = vmatpush.msra.mxu0 0.0
    %85 = vmatpush.msra.mxu0 0.0
    %86 = vmatpush.msra.mxu0 0.0
    %87 = vmatpush.msra.mxu0 0.0
    %88 = vmatpush.msra.mxu0 0.0
    %89 = vmatpush.msra.mxu0 0.0
    %90 = vmatpush.msra.mxu0 0.0
    %91 = vmatpush.msra.mxu0 0.0
    %92 = vmatpush.msra.mxu0 0.0
    %93 = vmatpush.msra.mxu0 0.0
    %94 = vmatpush.msra.mxu0 0.0
    %95 = vmatpush.msra.mxu0 %v74
    %96 = vmatpush.msra.mxu0 %v69
    %97 = vmatpush.msra.mxu0 %v64
    %98 = vmatpush.msra.mxu0 %v59
    %99 = vmatmul.f32.gmra.mxu0 %v81
    %v100 = vpop.f32.mrf.mxu0
    %v101 = vadd.f32 0.0, %v100
    %102 = vdwg.mxu0
    %103 = vmatpush.msra.mxu0 0.0
    %104 = vmatpush.msra.mxu0 0.0
    %105 = vmatpush.msra.mxu0 0.0
    %106 = vmatpush.msra.mxu0 0.0
    %107 = vmatpush.msra.mxu0 0.0
    %108 = vmatpush.msra.mxu0 0.0
    %109 = vmatpush.msra.mxu0 0.0
    %110 = vmatpush.msra.mxu0 0.0
    %111 = vmatpush.msra.mxu0 0.0
    %112 = vmatpush.msra.mxu0 0.0
    %113 = vmatpush.msra.mxu0 0.0
    %114 = vmatpush.msra.mxu0 0.0
    %115 = vmatpush.msra.mxu0 %v75
    %116 = vmatpush.msra.mxu0 %v70
    %117 = vmatpush.msra.mxu0 %v65
    %118 = vmatpush.msra.mxu0 %v60
    %119 = vmatmul.f32.gmra.mxu0 %v81
    %v120 = vpop.f32.mrf.mxu0
    %v121 = vadd.f32 0.0, %v120
    %122 = vdwg.mxu0
    %123 = vmatpush.msra.mxu0 0.0
    %124 = vmatpush.msra.mxu0 0.0
    %125 = vmatpush.msra.mxu0 0.0
    %126 = vmatpush.msra.mxu0 0.0
    %127 = vmatpush.msra.mxu0 0.0
    %128 = vmatpush.msra.mxu0 0.0
    %129 = vmatpush.msra.mxu0 0.0
    %130 = vmatpush.msra.mxu0 0.0
    %131 = vmatpush.msra.mxu0 0.0
    %132 = vmatpush.msra.mxu0 0.0
    %133 = vmatpush.msra.mxu0 0.0
    %134 = vmatpush.msra.mxu0 0.0
    %135 = vmatpush.msra.mxu0 %v76
    %136 = vmatpush.msra.mxu0 %v71
    %137 = vmatpush.msra.mxu0 %v66
    %138 = vmatpush.msra.mxu0 %v61
    %139 = vmatmul.f32.gmra.mxu0 %v81
    %v140 = vpop.f32.mrf.mxu0
    %v141 = vadd.f32 0.0, %v140
    %142 = vdwg.mxu0
    %143 = vmatpush.msra.mxu0 0.0
    %144 = vmatpush.msra.mxu0 0.0
    %145 = vmatpush.msra.mxu0 0.0
    %146 = vmatpush.msra.mxu0 0.0
    %147 = vmatpush.msra.mxu0 0.0
    %148 = vmatpush.msra.mxu0 0.0
    %149 = vmatpush.msra.mxu0 0.0
    %150 = vmatpush.msra.mxu0 0.0
    %151 = vmatpush.msra.mxu0 0.0
    %152 = vmatpush.msra.mxu0 0.0
    %153 = vmatpush.msra.mxu0 0.0
    %154 = vmatpush.msra.mxu0 0.0
    %155 = vmatpush.msra.mxu0 %v77
    %156 = vmatpush.msra.mxu0 %v72
    %157 = vmatpush.msra.mxu0 %v67
    %158 = vmatpush.msra.mxu0 %v62
    %159 = vmatmul.f32.gmra.mxu0 %v81
    %v160 = vpop.f32.mrf.mxu0
    %v161 = vadd.f32 0.0, %v160
    %162 = vdwg.mxu0
    %163 = vmatpush.msra.mxu0 0.0
    %164 = vmatpush.msra.mxu0 0.0
    %165 = vmatpush.msra.mxu0 0.0
    %166 = vmatpush.msra.mxu0 0.0
    %167 = vmatpush.msra.mxu0 0.0
    %168 = vmatpush.msra.mxu0 0.0
    %169 = vmatpush.msra.mxu0 0.0
    %170 = vmatpush.msra.mxu0 0.0
    %171 = vmatpush.msra.mxu0 0.0
    %172 = vmatpush.msra.mxu0 0.0
    %173 = vmatpush.msra.mxu0 0.0
    %174 = vmatpush.msra.mxu0 0.0
    %175 = vmatpush.msra.mxu0 %v78
    %176 = vmatpush.msra.mxu0 %v73
    %177 = vmatpush.msra.mxu0 %v68
    %178 = vmatpush.msra.mxu0 %v63
    %179 = vmatmul.f32.gmra.mxu0 %v81
    %v180 = vpop.f32.mrf.mxu0
    %v181 = vadd.f32 0.0, %v180
    %182 = vdwg.mxu0
    %v183 = vld [vmem:[#allocation7] sm:$0xff]
    %v184 = vld [vmem:[#allocation7 + $0x8] sm:$0x3]
    %v187 = vperm.slane %v183, 1
    %v188 = vperm.slane %v183, 3
    %v189 = vperm.slane %v183, 5
    %v190 = vperm.slane %v183, 7
    %v191 = vperm.slane %v184, 1
    %v197 = vperm.slane %v187, 1
    %v198 = vperm.slane %v188, 1
    %v199 = vperm.slane %v189, 1
    %v200 = vperm.slane %v190, 1
    %v201 = vperm.slane %v191, 1
    %v202 = vsub.f32 %v101, %v197
    %v203 = vsub.f32 %v121, %v198
    %v204 = vsub.f32 %v141, %v199
    %v205 = vsub.f32 %v161, %v200
    %v206 = vsub.f32 %v181, %v201
    %v207 = vperm.slane %v183, 0
    %v208 = vperm.slane %v183, 2
    %v209 = vperm.slane %v183, 4
    %v210 = vperm.slane %v183, 6
    %v211 = vperm.slane %v184, 0
    %v217 = vperm.slane %v207, 0
    %v218 = vperm.slane %v208, 0
    %v219 = vperm.slane %v209, 0
    %v220 = vperm.slane %v210, 0
    %v221 = vperm.slane %v211, 0
    %v222 = vmul.f32 %v217, %v202
    %v223 = vmul.f32 %v218, %v203
    %v224 = vmul.f32 %v219, %v204
    %v225 = vmul.f32 %v220, %v205
    %v226 = vmul.f32 %v221, %v206
    %v227 = vmul.f32 %v222, %v202
    %v228 = vmul.f32 %v223, %v203
    %v229 = vmul.f32 %v224, %v204
    %v230 = vmul.f32 %v225, %v205
    %v231 = vmul.f32 %v226, %v206
    %v232 = vmul.f32 %v227, 1.442695
    %v233 = vpow.pop %v232
    %v234 = vmul.f32 %v228, 1.442695
    %v235 = vpow.pop %v234
    %v236 = vmul.f32 %v229, 1.442695
    %v237 = vpow.pop %v236
    %v238 = vmul.f32 %v230, 1.442695
    %v239 = vpow.pop %v238
    %v240 = vmul.f32 %v231, 1.442695
    %v241 = vpow.pop %v240
    %242 = vst [vmem:[#allocation8] sm:$0xff] %v233
    %243 = vst [vmem:[#allocation8 + $0x8] sm:$0xff] %v235
    %244 = vst [vmem:[#allocation8 + $0x10] sm:$0xff] %v237
    %245 = vst [vmem:[#allocation8 + $0x18] sm:$0xff] %v239
    %246 = vst [vmem:[#allocation8 + $0x20] sm:$0xff] %v241
    // Predicated region
    $region26: #{tpu_custom_call.1} parent=1 // pred_check
      _
    $region27: #{tpu_custom_call.1} parent=1 // pred_check_branch
      %248 = sbr.rel (0) target = $region29
    $region28: #{tpu_custom_call.1} parent=1 // pred_region
      %250 = vsyncadd [#allocation4], 0
      %s252 = sshll.u32 [#allocation8], 4
      %s253 = int_to_ptr.vmem [resolvable:$true] %s252
      %s254 = sshll.u32 %s3, 4
      %s255 = int_to_ptr.hbm [resolvable:$true] %s254
      %257 = dma.vmem_to_hbm [thread:$0]  %s253, 640, %s255, [#allocation4]
    $region29: #{tpu_custom_call.1} parent=1 // pred_fallthru
      _
    // Predicated region
    $region30: #{tpu_custom_call.1} parent=1 // pred_check
      _
    $region31: #{tpu_custom_call.1} parent=1 // pred_check_branch
      %259 = sbr.rel (0) target = $region33
    $region32: #{tpu_custom_call.1} parent=1 // pred_region
      %261 = dma.done [#allocation4], 640
    $region33: #{tpu_custom_call.1} parent=1 // pred_fallthru
      _
    %262 = vsyncpa [#allocation3], 1
    %263 = vsyncpa [#allocation6], 1
    %264 = vsyncpa [#allocation4], 1

</llo_original>
